<compile_context>
chip_gen: v7x
topology: tpu7x:2x2x1
jax: 0.10.0
libtpu: 0.0.40
codegen_flags: <defaults>
</compile_context>

<pallas_src>
import functools

import jax
import jax.numpy as jnp
from jax.experimental import pallas as pl
from jax.experimental.pallas import tpu as pltpu


def bilinear_classifier_kernel(h_att2_ref, h_src_ref, h_tgt_ref, h_arc_ref,
                               w_bil_ref, group_ref, b_bil_ref, w_lin_ref,
                               o_ref):
    cdt = w_bil_ref.dtype                     # compute dtype (bf16)

    h_src = h_src_ref[...]                    # [tn, H] f32
    h_tgt = h_tgt_ref[...]                    # [tn, H] f32
    H = h_tgt.shape[1]
    L = w_bil_ref.shape[1] // H               # true (unpadded) label count

    h_src_c = h_src.astype(cdt)
    h_tgt_c = h_tgt.astype(cdt)

    # ---- Bilinear term: bi[n,l] = sum_{i,j} h_src[n,i] * W[l,i,j] * h_tgt[n,j] + b[l]
    # t[n, l*H + j] = sum_i h_src[n,i] * W[l,i,j]   (bf16 MXU matmul, f32 acc)
    t = jnp.dot(h_src_c, w_bil_ref[...],
                preferred_element_type=jnp.float32)                    # [tn, L*H] f32
    # Gate by h_tgt replicated L times along the lane axis, in bf16 (one downcast
    # of t instead of an f32 upcast of the replicated gate).
    h_tgt_rep = jnp.concatenate([h_tgt_c] * L, axis=1)                 # [tn, L*H] bf16
    t_gated = t.astype(cdt) * h_tgt_rep                                # [tn, L*H] bf16
    # Group-sum over j per label via a bf16 0/1 matrix [L*H, Lp]; f32 accumulation.
    bi = jnp.dot(t_gated, group_ref[...],
                 preferred_element_type=jnp.float32) + b_bil_ref[...]  # [tn, Lp] f32

    # ---- Linear term; concat-gating done here on the VPU (no wrapper prep pass).
    src_arcs = jnp.concatenate([h_src, h_tgt, h_arc_ref[...]], axis=1)  # [tn, F] f32
    infeats = (h_att2_ref[...] * src_arcs).astype(cdt)                  # [tn, F] bf16
    lin = jnp.dot(infeats, w_lin_ref[...],
                  preferred_element_type=jnp.float32)                   # [tn, Lp] f32

    o_ref[...] = (bi + lin).astype(o_ref.dtype)


def _pick_tn(N, target_tn, min_grid_steps, min_tn):
    """Largest row tile <= target_tn dividing N, keeping >= min_grid_steps steps
    (without dropping below min_tn rows)."""
    tn = min(target_tn, N)
    while N % tn != 0:
        tn //= 2
    while N // tn < min_grid_steps and tn // 2 >= min_tn and N % (tn // 2) == 0:
        tn //= 2
    assert N % tn == 0 and tn % 8 == 0
    return tn


def make_bilinear_classifier(w_bil, b_bil, w_lin, *,
                             target_tn=512, min_grid_steps=2, min_tn=128,
                             compute_dtype=jnp.bfloat16, out_dtype=None):
    """One-time parameter glue + returns a jitted forward(h_att2, h_src, h_tgt, h_arc).

    Per-generation tuning (review):
      v5e/v6e : single TensorCore -> target_tn=512..1024, min_grid_steps=1.
      v7x     : two TensorCores, 64 MiB VMEM -> min_grid_steps=4 (>=2 steps/core),
                min_tn=64 at small N; re-derive target_tn at production H (live
                [tn, L*H] f32 intermediate scales fast).
    """
    L, H, H2 = w_bil.shape
    assert H == H2 and b_bil.shape == (L,)
    F = w_lin.shape[1]
    A = F - 2 * H
    assert A >= 0 and w_lin.shape == (L, F)
    if out_dtype is None:
        out_dtype = compute_dtype          # bf16 output halves the largest HBM stream

    # Lane-dense label dim: zero-pad L up to a multiple of 128.
    Lp = max(128, ((L + 127) // 128) * 128)

    # ---- one-time glue (hoisted out of the per-call path) ----
    # torch nn.Bilinear weight [L, H, H] -> [H, L*H]: w2d[i, l*H + j] == W[l, i, j]
    w_bil2d = jnp.transpose(w_bil, (1, 0, 2)).reshape(H, L * H).astype(compute_dtype)
    # 0/1 group-sum matrix (exact in bf16), columns zero-padded: group[l*H+j, l] = 1.
    group = (jnp.arange(L * H)[:, None] // H
             == jnp.arange(Lp)[None, :]).astype(compute_dtype)          # [L*H, Lp]
    b_pad = jnp.zeros((1, Lp), jnp.float32).at[0, :L].set(b_bil.astype(jnp.float32))
    w_lin_t = jnp.zeros((F, Lp), compute_dtype).at[:, :L].set(w_lin.T.astype(compute_dtype))

    # Constant-index weights: fetch once, single-buffered (reclaims VMEM on v7x).
    def weight_spec(shape):
        return pl.BlockSpec(shape, lambda i: (0, 0), pipeline_mode=pl.Buffered(1))

    @functools.partial(jax.jit, static_argnames=("return_padded",))
    def forward(h_att2, h_src, h_tgt, h_arc, *, return_padded=False):
        N = h_src.shape[0]
        assert h_src.shape == (N, H) and h_tgt.shape == (N, H)
        assert h_arc.shape == (N, A) and h_att2.shape == (N, F)
        assert N % 8 == 0

        tn = _pick_tn(N, target_tn, min_grid_steps, min_tn)
        grid = (N // tn,)

        out_padded = pl.pallas_call(
            bilinear_classifier_kernel,
            out_shape=jax.ShapeDtypeStruct((N, Lp), out_dtype),
            grid=grid,
            in_specs=[
                pl.BlockSpec((tn, F), lambda i: (i, 0)),    # h_att2 (f32, cast in-kernel)
                pl.BlockSpec((tn, H), lambda i: (i, 0)),    # h_src
                pl.BlockSpec((tn, H), lambda i: (i, 0)),    # h_tgt
                pl.BlockSpec((tn, A), lambda i: (i, 0)),    # h_arc
                weight_spec((H, L * H)),                    # bilinear weight [H, L*H] bf16
                weight_spec((L * H, Lp)),                   # group-sum matrix bf16
                weight_spec((1, Lp)),                       # bilinear bias (padded, f32)
                weight_spec((F, Lp)),                       # linear weight^T (padded) bf16
            ],
            out_specs=pl.BlockSpec((tn, Lp), lambda i: (i, 0)),
            compiler_params=pltpu.CompilerParams(
                dimension_semantics=("parallel",)),
        )(h_att2, h_src, h_tgt, h_arc, w_bil2d, group, b_pad, w_lin_t)

        if return_padded:
            # Let the consumer fuse the [:, :L] slice (padded columns are exact zeros
            # from the zero-padded weights/bias).
            return out_padded
        return out_padded[:, :L]

    return forward


if __name__ == "__main__":
    # Small deterministic shapes consistent with the module.
    N, H, A, L = 256, 32, 16, 8          # rows, hdim, arc_dim, num_label
    F = 2 * H + A

    key = jax.random.PRNGKey(0)
    ks = jax.random.split(key, 7)

    h_att2 = jax.random.normal(ks[0], (N, F), dtype=jnp.float32)
    h_src = jax.random.normal(ks[1], (N, H), dtype=jnp.float32)
    h_tgt = jax.random.normal(ks[2], (N, H), dtype=jnp.float32)
    h_arc = jax.random.normal(ks[3], (N, A), dtype=jnp.float32)

    # Deterministic parameter init (PyTorch-style uniform bounds), shapes per __init__.
    bil_bound = 1.0 / (H ** 0.5)
    w_bil = jax.random.uniform(ks[4], (L, H, H), dtype=jnp.float32,
                               minval=-bil_bound, maxval=bil_bound)
    b_bil = jax.random.uniform(ks[5], (L,), dtype=jnp.float32,
                               minval=-bil_bound, maxval=bil_bound)
    lin_bound = 1.0 / (F ** 0.5)
    w_lin = jax.random.uniform(ks[6], (L, F), dtype=jnp.float32,
                               minval=-lin_bound, maxval=lin_bound)

    # One-time parameter prep (hoisted); the returned forward is jitted.
    classifier = make_bilinear_classifier(w_bil, b_bil, w_lin)

    out = classifier(h_att2, h_src, h_tgt, h_arc)
    out = jax.block_until_ready(out)

    # Pure-JAX (f32) reference for correctness.  (Reference module computes softmax
    # but returns the pre-softmax output, so no softmax here.)
    bi_ref = jnp.einsum('ni,lij,nj->nl', h_src, w_bil, h_tgt) + b_bil
    src_arcs = jnp.concatenate([h_src, h_tgt, h_arc], axis=1)
    ref = bi_ref + (h_att2 * src_arcs) @ w_lin.T

    assert out.shape == (N, L)
    # bf16 inputs/weights/output with f32 accumulation -> loosened tolerance.
    assert jnp.allclose(out.astype(jnp.float32), ref, atol=1e-1, rtol=5e-2), \
        "mismatch vs reference"
    print("KERNEL_OK")
</pallas_src>

<mosaic_0001>
module attributes {stable_mosaic.version = 11 : i64} {
  func.func @bilinear_classifier_kernel(%arg0: i32, %arg1: memref<128x80xf32, #tpu.memory_space<vmem>>, %arg2: memref<128x32xf32, #tpu.memory_space<vmem>>, %arg3: memref<128x32xf32, #tpu.memory_space<vmem>>, %arg4: memref<128x16xf32, #tpu.memory_space<vmem>>, %arg5: memref<32x256xbf16, #tpu.memory_space<vmem>>, %arg6: memref<256x128xbf16, #tpu.memory_space<vmem>>, %arg7: memref<1x128xf32, #tpu.memory_space<vmem>>, %arg8: memref<80x128xbf16, #tpu.memory_space<vmem>>, %arg9: memref<128x128xbf16, #tpu.memory_space<vmem>>) attributes {dimension_semantics = [#tpu.dimension_semantics<parallel>], iteration_bounds = array<i64: 2>, scalar_prefetch = 0 : i64, scratch_operands = 0 : i64, tpu.core_type = #tpu.core_type<tc>, window_params = [{transform_indices = @transform_0, window_bounds = array<i64: 128, 80>}, {transform_indices = @transform_1, window_bounds = array<i64: 128, 32>}, {transform_indices = @transform_2, window_bounds = array<i64: 128, 32>}, {transform_indices = @transform_3, window_bounds = array<i64: 128, 16>}, {pipeline_mode = #tpu.pipeline_mode<synchronous>, transform_indices = @transform_4, window_bounds = array<i64: 32, 256>}, {pipeline_mode = #tpu.pipeline_mode<synchronous>, transform_indices = @transform_5, window_bounds = array<i64: 256, 128>}, {pipeline_mode = #tpu.pipeline_mode<synchronous>, transform_indices = @transform_6, window_bounds = array<i64: 1, 128>}, {pipeline_mode = #tpu.pipeline_mode<synchronous>, transform_indices = @transform_7, window_bounds = array<i64: 80, 128>}, {transform_indices = @transform_8, window_bounds = array<i64: 128, 128>}]} {
    %c0 = arith.constant 0 : index
    %c0_0 = arith.constant 0 : index
    %0 = vector.load %arg2[%c0, %c0_0] : memref<128x32xf32, #tpu.memory_space<vmem>>, vector<128x32xf32>
    %c0_1 = arith.constant 0 : index
    %c0_2 = arith.constant 0 : index
    %1 = vector.load %arg3[%c0_1, %c0_2] : memref<128x32xf32, #tpu.memory_space<vmem>>, vector<128x32xf32>
    %2 = arith.truncf %0 : vector<128x32xf32> to vector<128x32xbf16>
    %3 = arith.truncf %1 : vector<128x32xf32> to vector<128x32xbf16>
    %c0_3 = arith.constant 0 : index
    %c0_4 = arith.constant 0 : index
    %4 = vector.load %arg5[%c0_3, %c0_4] : memref<32x256xbf16, #tpu.memory_space<vmem>>, vector<32x256xbf16>
    %cst = arith.constant dense<0.000000e+00> : vector<128x256xf32>
    %5 = tpu.matmul %2, %4, %cst {dimension_numbers = #tpu.dot_dimension_numbers<[1], [0], [0], [1], [0, 0, 1, 1], [], []>} : vector<128x32xbf16>, vector<32x256xbf16>, vector<128x256xf32> -> vector<128x256xf32>
    %6 = tpu.concatenate %3, %3, %3, %3, %3, %3, %3, %3 in 1 : vector<128x32xbf16>, vector<128x32xbf16>, vector<128x32xbf16>, vector<128x32xbf16>, vector<128x32xbf16>, vector<128x32xbf16>, vector<128x32xbf16>, vector<128x32xbf16> -> vector<128x256xbf16>
    %7 = arith.truncf %5 : vector<128x256xf32> to vector<128x256xbf16>
    %8 = arith.mulf %7, %6 : vector<128x256xbf16>
    %c0_5 = arith.constant 0 : index
    %c0_6 = arith.constant 0 : index
    %9 = vector.load %arg6[%c0_5, %c0_6] : memref<256x128xbf16, #tpu.memory_space<vmem>>, vector<256x128xbf16>
    %cst_7 = arith.constant dense<0.000000e+00> : vector<128x128xf32>
    %10 = tpu.matmul %8, %9, %cst_7 {dimension_numbers = #tpu.dot_dimension_numbers<[1], [0], [0], [1], [0, 0, 1, 1], [], []>} : vector<128x256xbf16>, vector<256x128xbf16>, vector<128x128xf32> -> vector<128x128xf32>
    %c0_8 = arith.constant 0 : index
    %c0_9 = arith.constant 0 : index
    %11 = vector.load %arg7[%c0_8, %c0_9] : memref<1x128xf32, #tpu.memory_space<vmem>>, vector<1x128xf32>
    %12 = vector.broadcast %11 : vector<1x128xf32> to vector<128x128xf32>
    %13 = arith.addf %10, %12 : vector<128x128xf32>
    %c0_10 = arith.constant 0 : index
    %c0_11 = arith.constant 0 : index
    %14 = vector.load %arg4[%c0_10, %c0_11] : memref<128x16xf32, #tpu.memory_space<vmem>>, vector<128x16xf32>
    %15 = tpu.concatenate %0, %1, %14 in 1 : vector<128x32xf32>, vector<128x32xf32>, vector<128x16xf32> -> vector<128x80xf32>
    %c0_12 = arith.constant 0 : index
    %c0_13 = arith.constant 0 : index
    %16 = vector.load %arg1[%c0_12, %c0_13] : memref<128x80xf32, #tpu.memory_space<vmem>>, vector<128x80xf32>
    %17 = arith.mulf %16, %15 : vector<128x80xf32>
    %18 = arith.truncf %17 : vector<128x80xf32> to vector<128x80xbf16>
    %c0_14 = arith.constant 0 : index
    %c0_15 = arith.constant 0 : index
    %19 = vector.load %arg8[%c0_14, %c0_15] : memref<80x128xbf16, #tpu.memory_space<vmem>>, vector<80x128xbf16>
    %cst_16 = arith.constant dense<0.000000e+00> : vector<128x128xf32>
    %20 = tpu.matmul %18, %19, %cst_16 {dimension_numbers = #tpu.dot_dimension_numbers<[1], [0], [0], [1], [0, 0, 1, 1], [], []>} : vector<128x80xbf16>, vector<80x128xbf16>, vector<128x128xf32> -> vector<128x128xf32>
    %21 = arith.addf %13, %20 : vector<128x128xf32>
    %22 = arith.truncf %21 : vector<128x128xf32> to vector<128x128xbf16>
    %c0_17 = arith.constant 0 : index
    %c0_18 = arith.constant 0 : index
    %23 = vector.load %arg9[%c0_17, %c0_18] : memref<128x128xbf16, #tpu.memory_space<vmem>>, vector<128x128xbf16>
    tpu.vector_store %arg9[%c0_17, %c0_18], %22 {strides = array<i32>} : memref<128x128xbf16, #tpu.memory_space<vmem>>, vector<128x128xbf16>,
    return
  }
  func.func @transform_0(%arg0: i32) -> (i32, i32) {
    %c0_i32 = arith.constant 0 : i32
    %c0_i32_0 = arith.constant 0 : i32
    return %arg0, %c0_i32 : i32, i32
  }
  func.func @transform_1(%arg0: i32) -> (i32, i32) {
    %c0_i32 = arith.constant 0 : i32
    %c0_i32_0 = arith.constant 0 : i32
    return %arg0, %c0_i32 : i32, i32
  }
  func.func @transform_2(%arg0: i32) -> (i32, i32) {
    %c0_i32 = arith.constant 0 : i32
    %c0_i32_0 = arith.constant 0 : i32
    return %arg0, %c0_i32 : i32, i32
  }
  func.func @transform_3(%arg0: i32) -> (i32, i32) {
    %c0_i32 = arith.constant 0 : i32
    %c0_i32_0 = arith.constant 0 : i32
    return %arg0, %c0_i32 : i32, i32
  }
  func.func @transform_4(%arg0: i32) -> (i32, i32) {
    %c0_i32 = arith.constant 0 : i32
    %c0_i32_0 = arith.constant 0 : i32
    %c0_i32_1 = arith.constant 0 : i32
    return %c0_i32, %c0_i32_0 : i32, i32
  }
  func.func @transform_5(%arg0: i32) -> (i32, i32) {
    %c0_i32 = arith.constant 0 : i32
    %c0_i32_0 = arith.constant 0 : i32
    %c0_i32_1 = arith.constant 0 : i32
    return %c0_i32, %c0_i32_0 : i32, i32
  }
  func.func @transform_6(%arg0: i32) -> (i32, i32) {
    %c0_i32 = arith.constant 0 : i32
    %c0_i32_0 = arith.constant 0 : i32
    %c0_i32_1 = arith.constant 0 : i32
    return %c0_i32, %c0_i32_0 : i32, i32
  }
  func.func @transform_7(%arg0: i32) -> (i32, i32) {
    %c0_i32 = arith.constant 0 : i32
    %c0_i32_0 = arith.constant 0 : i32
    %c0_i32_1 = arith.constant 0 : i32
    return %c0_i32, %c0_i32_0 : i32, i32
  }
  func.func @transform_8(%arg0: i32) -> (i32, i32) {
    %c0_i32 = arith.constant 0 : i32
    %c0_i32_0 = arith.constant 0 : i32
    return %arg0, %c0_i32 : i32, i32
  }
}

</mosaic_0001>

<llo_original>
// kernel: forward.1
$region0: #{forward.1}
  #allocation0 [shape = 'u32[]', space=smem, size = 0x4, offset = 0x4, fixed_abs, tag = 'smem constant byte address 0x4 - core index']
  #allocation1 [shape = 'u32[144,128]{1,0:T(1,128)}', space=vmem, size = 0x12000, scoped, tag = 'internal scratch']
  %s0 = inlined_call_operand.vmem [shape: f32[256,80], index: 0, kind: input, shape index: {}]
  %s1 = inlined_call_operand.vmem [shape: f32[256,32], index: 1, kind: input, shape index: {}]
  %s2 = inlined_call_operand.vmem [shape: f32[256,32], index: 2, kind: input, shape index: {}]
  %s3 = inlined_call_operand.vmem [shape: f32[256,16], index: 3, kind: input, shape index: {}]
  %s4 = inlined_call_operand.vmem [shape: bf16[32,256], index: 4, kind: input, shape index: {}]
  %s5 = inlined_call_operand.vmem [shape: bf16[256,128], index: 5, kind: input, shape index: {}]
  %s6 = inlined_call_operand.vmem [shape: f32[1,128], index: 6, kind: input, shape index: {}]
  %s7 = inlined_call_operand.vmem [shape: bf16[80,128], index: 7, kind: input, shape index: {}]
  %s8 = inlined_call_operand.vmem [shape: bf16[256,128], index: 8, kind: output, shape index: {}]
  %s9 = sld [smem:[#allocation0]]
  $region65: #{forward.1} parent=0
    _
  %s11 = ssub.s32 1, %s9
  %s12 = scalar_select 0, %s11, %s9
  loop: start=0, step=1, limit=4
  $region2: #{forward.1} parent=0 // loop_pre_header
    _
  $region3: #{forward.1} parent=0 // loop_header
    %s14 = sphi 0, %s18
    %p15 = scmp.ge.s32.totalorder %s14, 4
    %s24 = sphi 0, %s26
    %s27 = sphi 0, %s24
    %s28 = sphi 0, %s27
    %s44 = sphi 0, %s28
    %s50 = sphi 0, %s52
    %s53 = sphi 0, %s50
    %s54 = sphi 0, %s53
    %s70 = sphi 0, %s54
    %s76 = sphi 0, %s78
    %s79 = sphi 0, %s76
    %s80 = sphi 0, %s79
    %s96 = sphi 0, %s80
    %s102 = sphi 0, %s104
    %s105 = sphi 0, %s102
    %s106 = sphi 0, %s105
    %s122 = sphi 0, %s106
    %s126 = sphi 0, %s126
    %s128 = sphi 0, %s126
    %s129 = sphi 0, %s128
    %s143 = sphi 0, %s129
    %s147 = sphi 0, %s147
    %s149 = sphi 0, %s147
    %s150 = sphi 0, %s149
    %s164 = sphi 0, %s150
    %s168 = sphi 0, %s168
    %s170 = sphi 0, %s168
    %s171 = sphi 0, %s170
    %s185 = sphi 0, %s171
    %s189 = sphi 0, %s189
    %s191 = sphi 0, %s189
    %s192 = sphi 0, %s191
    %s206 = sphi 0, %s192
    %s212 = sphi 0, %s214
    %s215 = sphi 0, %s212
    %s216 = sphi 0, %s215
    %s232 = sphi 0, %s216
  $region4: #{forward.1} parent=0 // loop_header_branch
    %17 = sbr.rel (%p15) target = $region8
  $region5: #{forward.1} parent=0 // loop_body
    %s19 = ssub.s32 %s14, 1
    %s20 = ssub.s32 %s14, 2
    %s21 = sadd.s32 %s14, 1
    %s22 = ssub.s32 %s14, %s21
    %p23 = scmp.eq.s32.totalorder %s22, 0
    %s25 = sadd.s32 %s24, 1
    %s26 = scalar_select %p23, %s24, %s25
    %p29 = pneg %p23
    %p30 = scmp.eq.s32.totalorder %s14, 1
    %p31 = por %p29, %p30
    %p32 = scmp.ne.s32.totalorder %s24, %s27
    %p33 = scmp.eq.s32.totalorder %s14, 0
    %p34 = por %p32, %p33
    %p35 = scmp.ne.s32.totalorder %s24, %s27
    %p36 = scmp.eq.s32.totalorder %s19, 1
    %p37 = por %p35, %p36
    %p38 = scmp.ne.s32.totalorder %s27, %s28
    %p39 = scmp.eq.s32.totalorder %s19, 0
    %p40 = por %p38, %p39
    %p41 = scmp.ne.s32.totalorder %s27, %s28
    %p42 = scmp.eq.s32.totalorder %s20, 1
    %p43 = por %p41, %p42
    %p45 = scmp.ne.s32.totalorder %s28, %s44
    %p46 = scmp.eq.s32.totalorder %s20, 0
    %p47 = por %p45, %p46
    %s48 = ssub.s32 %s14, %s21
    %p49 = scmp.eq.s32.totalorder %s48, 0
    %s51 = sadd.s32 %s50, 1
    %s52 = scalar_select %p49, %s50, %s51
    %p55 = pneg %p49
    %p56 = scmp.eq.s32.totalorder %s14, 1
    %p57 = por %p55, %p56
    %p58 = scmp.ne.s32.totalorder %s50, %s53
    %p59 = scmp.eq.s32.totalorder %s14, 0
    %p60 = por %p58, %p59
    %p61 = scmp.ne.s32.totalorder %s50, %s53
    %p62 = scmp.eq.s32.totalorder %s19, 1
    %p63 = por %p61, %p62
    %p64 = scmp.ne.s32.totalorder %s53, %s54
    %p65 = scmp.eq.s32.totalorder %s19, 0
    %p66 = por %p64, %p65
    %p67 = scmp.ne.s32.totalorder %s53, %s54
    %p68 = scmp.eq.s32.totalorder %s20, 1
    %p69 = por %p67, %p68
    %p71 = scmp.ne.s32.totalorder %s54, %s70
    %p72 = scmp.eq.s32.totalorder %s20, 0
    %p73 = por %p71, %p72
    %s74 = ssub.s32 %s14, %s21
    %p75 = scmp.eq.s32.totalorder %s74, 0
    %s77 = sadd.s32 %s76, 1
    %s78 = scalar_select %p75, %s76, %s77
    %p81 = pneg %p75
    %p82 = scmp.eq.s32.totalorder %s14, 1
    %p83 = por %p81, %p82
    %p84 = scmp.ne.s32.totalorder %s76, %s79
    %p85 = scmp.eq.s32.totalorder %s14, 0
    %p86 = por %p84, %p85
    %p87 = scmp.ne.s32.totalorder %s76, %s79
    %p88 = scmp.eq.s32.totalorder %s19, 1
    %p89 = por %p87, %p88
    %p90 = scmp.ne.s32.totalorder %s79, %s80
    %p91 = scmp.eq.s32.totalorder %s19, 0
    %p92 = por %p90, %p91
    %p93 = scmp.ne.s32.totalorder %s79, %s80
    %p94 = scmp.eq.s32.totalorder %s20, 1
    %p95 = por %p93, %p94
    %p97 = scmp.ne.s32.totalorder %s80, %s96
    %p98 = scmp.eq.s32.totalorder %s20, 0
    %p99 = por %p97, %p98
    %s100 = ssub.s32 %s14, %s21
    %p101 = scmp.eq.s32.totalorder %s100, 0
    %s103 = sadd.s32 %s102, 1
    %s104 = scalar_select %p101, %s102, %s103
    %p107 = pneg %p101
    %p108 = scmp.eq.s32.totalorder %s14, 1
    %p109 = por %p107, %p108
    %p110 = scmp.ne.s32.totalorder %s102, %s105
    %p111 = scmp.eq.s32.totalorder %s14, 0
    %p112 = por %p110, %p111
    %p113 = scmp.ne.s32.totalorder %s102, %s105
    %p114 = scmp.eq.s32.totalorder %s19, 1
    %p115 = por %p113, %p114
    %p116 = scmp.ne.s32.totalorder %s105, %s106
    %p117 = scmp.eq.s32.totalorder %s19, 0
    %p118 = por %p116, %p117
    %p119 = scmp.ne.s32.totalorder %s105, %s106
    %p120 = scmp.eq.s32.totalorder %s20, 1
    %p121 = por %p119, %p120
    %p123 = scmp.ne.s32.totalorder %s106, %s122
    %p124 = scmp.eq.s32.totalorder %s20, 0
    %p125 = por %p123, %p124
    %s127 = sadd.s32 %s126, 1
    %p130 = scmp.eq.s32.totalorder %s14, 1
    %p131 = scmp.ne.s32.totalorder %s126, %s128
    %p132 = scmp.eq.s32.totalorder %s14, 0
    %p133 = por %p131, %p132
    %p134 = scmp.ne.s32.totalorder %s126, %s128
    %p135 = scmp.eq.s32.totalorder %s19, 1
    %p136 = por %p134, %p135
    %p137 = scmp.ne.s32.totalorder %s128, %s129
    %p138 = scmp.eq.s32.totalorder %s19, 0
    %p139 = por %p137, %p138
    %p140 = scmp.ne.s32.totalorder %s128, %s129
    %p141 = scmp.eq.s32.totalorder %s20, 1
    %p142 = por %p140, %p141
    %p144 = scmp.ne.s32.totalorder %s129, %s143
    %p145 = scmp.eq.s32.totalorder %s20, 0
    %p146 = por %p144, %p145
    %s148 = sadd.s32 %s147, 1
    %p151 = scmp.eq.s32.totalorder %s14, 1
    %p152 = scmp.ne.s32.totalorder %s147, %s149
    %p153 = scmp.eq.s32.totalorder %s14, 0
    %p154 = por %p152, %p153
    %p155 = scmp.ne.s32.totalorder %s147, %s149
    %p156 = scmp.eq.s32.totalorder %s19, 1
    %p157 = por %p155, %p156
    %p158 = scmp.ne.s32.totalorder %s149, %s150
    %p159 = scmp.eq.s32.totalorder %s19, 0
    %p160 = por %p158, %p159
    %p161 = scmp.ne.s32.totalorder %s149, %s150
    %p162 = scmp.eq.s32.totalorder %s20, 1
    %p163 = por %p161, %p162
    %p165 = scmp.ne.s32.totalorder %s150, %s164
    %p166 = scmp.eq.s32.totalorder %s20, 0
    %p167 = por %p165, %p166
    %s169 = sadd.s32 %s168, 1
    %p172 = scmp.eq.s32.totalorder %s14, 1
    %p173 = scmp.ne.s32.totalorder %s168, %s170
    %p174 = scmp.eq.s32.totalorder %s14, 0
    %p175 = por %p173, %p174
    %p176 = scmp.ne.s32.totalorder %s168, %s170
    %p177 = scmp.eq.s32.totalorder %s19, 1
    %p178 = por %p176, %p177
    %p179 = scmp.ne.s32.totalorder %s170, %s171
    %p180 = scmp.eq.s32.totalorder %s19, 0
    %p181 = por %p179, %p180
    %p182 = scmp.ne.s32.totalorder %s170, %s171
    %p183 = scmp.eq.s32.totalorder %s20, 1
    %p184 = por %p182, %p183
    %p186 = scmp.ne.s32.totalorder %s171, %s185
    %p187 = scmp.eq.s32.totalorder %s20, 0
    %p188 = por %p186, %p187
    %s190 = sadd.s32 %s189, 1
    %p193 = scmp.eq.s32.totalorder %s14, 1
    %p194 = scmp.ne.s32.totalorder %s189, %s191
    %p195 = scmp.eq.s32.totalorder %s14, 0
    %p196 = por %p194, %p195
    %p197 = scmp.ne.s32.totalorder %s189, %s191
    %p198 = scmp.eq.s32.totalorder %s19, 1
    %p199 = por %p197, %p198
    %p200 = scmp.ne.s32.totalorder %s191, %s192
    %p201 = scmp.eq.s32.totalorder %s19, 0
    %p202 = por %p200, %p201
    %p203 = scmp.ne.s32.totalorder %s191, %s192
    %p204 = scmp.eq.s32.totalorder %s20, 1
    %p205 = por %p203, %p204
    %p207 = scmp.ne.s32.totalorder %s192, %s206
    %p208 = scmp.eq.s32.totalorder %s20, 0
    %p209 = por %p207, %p208
    %s210 = ssub.s32 %s14, %s21
    %p211 = scmp.eq.s32.totalorder %s210, 0
    %s213 = sadd.s32 %s212, 1
    %s214 = scalar_select %p211, %s212, %s213
    %p217 = pneg %p211
    %p218 = scmp.eq.s32.totalorder %s14, 1
    %p219 = por %p217, %p218
    %p220 = scmp.ne.s32.totalorder %s212, %s215
    %p221 = scmp.eq.s32.totalorder %s14, 0
    %p222 = por %p220, %p221
    %p223 = scmp.ne.s32.totalorder %s212, %s215
    %p224 = scmp.eq.s32.totalorder %s19, 1
    %p225 = por %p223, %p224
    %p226 = scmp.ne.s32.totalorder %s215, %s216
    %p227 = scmp.eq.s32.totalorder %s19, 0
    %p228 = por %p226, %p227
    %p229 = scmp.ne.s32.totalorder %s215, %s216
    %p230 = scmp.eq.s32.totalorder %s20, 1
    %p231 = por %p229, %p230
    %p233 = scmp.ne.s32.totalorder %s216, %s232
    %p234 = scmp.eq.s32.totalorder %s20, 0
    %p235 = por %p233, %p234
    %p236 = scmp.le.s32.totalorder 1, %s14
    %p237 = scmp.lt.s32.totalorder %s14, 3
    %p238 = pnand %p236, %p237
    %p239 = pneg %p238
    // Predicated region
    $region9: #{forward.1} parent=5 // pred_check
      _
    $region10: #{forward.1} parent=5 // pred_check_branch
      %241 = sbr.rel (%p238) target = $region12
    $region11: #{forward.1} parent=5 // pred_region
      %s242 = ssub.s32 %s14, 1
      // Predicated region
      $region13: #{forward.1} parent=11 // pred_check
        %p243 = pneg %p139
      $region14: #{forward.1} parent=11 // pred_check_branch
        %245 = sbr.rel (%p243) target = $region16
      $region15: #{forward.1} parent=11 // pred_region
        _
      $region16: #{forward.1} parent=11 // pred_fallthru
        _
      // Predicated region
      $region17: #{forward.1} parent=11 // pred_check
        %p246 = pneg %p160
      $region18: #{forward.1} parent=11 // pred_check_branch
        %248 = sbr.rel (%p246) target = $region20
      $region19: #{forward.1} parent=11 // pred_region
        _
      $region20: #{forward.1} parent=11 // pred_fallthru
        _
      // Predicated region
      $region21: #{forward.1} parent=11 // pred_check
        %p249 = pneg %p181
      $region22: #{forward.1} parent=11 // pred_check_branch
        %251 = sbr.rel (%p249) target = $region24
      $region23: #{forward.1} parent=11 // pred_region
        _
      $region24: #{forward.1} parent=11 // pred_fallthru
        _
      // Predicated region
      $region25: #{forward.1} parent=11 // pred_check
        %p252 = pneg %p202
      $region26: #{forward.1} parent=11 // pred_check_branch
        %254 = sbr.rel (%p252) target = $region28
      $region27: #{forward.1} parent=11 // pred_region
        _
      $region28: #{forward.1} parent=11 // pred_fallthru
        _
    $region12: #{forward.1} parent=5 // pred_fallthru
      _
    %p255 = scmp.lt.s32.totalorder %s14, 2
    // Predicated region
    $region29: #{forward.1} parent=5 // pred_check
      %p256 = pneg %p255
    $region30: #{forward.1} parent=5 // pred_check_branch
      %258 = sbr.rel (%p256) target = $region32
    $region31: #{forward.1} parent=5 // pred_region
      // Predicated region
      $region33: #{forward.1} parent=31 // pred_check
        %p259 = pneg %p34
      $region34: #{forward.1} parent=31 // pred_check_branch
        %261 = sbr.rel (%p259) target = $region36
      $region35: #{forward.1} parent=31 // pred_region
        %s262 = smul.u32 16, %s14
        %p263 = scmp.lt.s32.totalorder %s262, 31
        %s264 = scalar_select %p263, %s262, 31
        %s265 = smul.addr %s264, 8
        %s266 = scalar_lea.vmem %s0, %s265
        %s267 = smul.u32 16, %s14
      $region36: #{forward.1} parent=31 // pred_fallthru
        _
      // Predicated region
      $region37: #{forward.1} parent=31 // pred_check
        %p268 = pneg %p60
      $region38: #{forward.1} parent=31 // pred_check_branch
        %270 = sbr.rel (%p268) target = $region40
      $region39: #{forward.1} parent=31 // pred_region
        %s271 = smul.u32 16, %s14
        %p272 = scmp.lt.s32.totalorder %s271, 31
        %s273 = scalar_select %p272, %s271, 31
        %s274 = smul.addr %s273, 8
        %s275 = scalar_lea.vmem %s1, %s274
        %s276 = smul.u32 16, %s14
      $region40: #{forward.1} parent=31 // pred_fallthru
        _
      // Predicated region
      $region41: #{forward.1} parent=31 // pred_check
        %p277 = pneg %p86
      $region42: #{forward.1} parent=31 // pred_check_branch
        %279 = sbr.rel (%p277) target = $region44
      $region43: #{forward.1} parent=31 // pred_region
        %s280 = smul.u32 16, %s14
        %p281 = scmp.lt.s32.totalorder %s280, 31
        %s282 = scalar_select %p281, %s280, 31
        %s283 = smul.addr %s282, 8
        %s284 = scalar_lea.vmem %s2, %s283
        %s285 = smul.u32 16, %s14
      $region44: #{forward.1} parent=31 // pred_fallthru
        _
      // Predicated region
      $region45: #{forward.1} parent=31 // pred_check
        %p286 = pneg %p112
      $region46: #{forward.1} parent=31 // pred_check_branch
        %288 = sbr.rel (%p286) target = $region48
      $region47: #{forward.1} parent=31 // pred_region
        %s289 = smul.u32 16, %s14
        %p290 = scmp.lt.s32.totalorder %s289, 31
        %s291 = scalar_select %p290, %s289, 31
        %s292 = smul.addr %s291, 8
        %s293 = scalar_lea.vmem %s3, %s292
        %s294 = smul.u32 16, %s14
      $region48: #{forward.1} parent=31 // pred_fallthru
        _
    $region32: #{forward.1} parent=5 // pred_fallthru
      _
    %p295 = scmp.le.s32.totalorder 1, %s14
    %p296 = scmp.lt.s32.totalorder %s14, 3
    %p297 = pnand %p295, %p296
    %p298 = pneg %p297
    // Predicated region
    $region49: #{forward.1} parent=5 // pred_check
      _
    $region50: #{forward.1} parent=5 // pred_check_branch
      %300 = sbr.rel (%p297) target = $region52
    $region51: #{forward.1} parent=5 // pred_region
      %s301 = ssub.s32 %s14, 1
      %s302 = smul.u32 16, %s19
      %p303 = scmp.lt.s32.totalorder %s302, 31
      %s304 = scalar_select %p303, %s302, 31
      %s305 = smul.addr %s304, 8
      %s306 = scalar_lea.vmem %s0, %s305
      %p307 = pneg %p40
      %p308 = pneg %p37
      %s309 = smul.u32 16, %s19
      %p310 = scmp.lt.s32.totalorder %s309, 31
      %s311 = scalar_select %p310, %s309, 31
      %s312 = smul.addr %s311, 8
      %s313 = scalar_lea.vmem %s1, %s312
      %p314 = pneg %p66
      %p315 = pneg %p63
      %s316 = smul.u32 16, %s19
      %p317 = scmp.lt.s32.totalorder %s316, 31
      %s318 = scalar_select %p317, %s316, 31
      %s319 = smul.addr %s318, 8
      %s320 = scalar_lea.vmem %s2, %s319
      %p321 = pneg %p92
      %p322 = pneg %p89
      %s323 = smul.u32 16, %s19
      %p324 = scmp.lt.s32.totalorder %s323, 31
      %s325 = scalar_select %p324, %s323, 31
      %s326 = smul.addr %s325, 8
      %s327 = scalar_lea.vmem %s3, %s326
      %p328 = pneg %p118
      %p329 = pneg %p115
      %p330 = pneg %p139
      %p331 = pneg %p136
      %p332 = pneg %p160
      %p333 = pneg %p157
      %p334 = pneg %p181
      %p335 = pneg %p178
      %p336 = pneg %p202
      %p337 = pneg %p199
      %p338 = pneg %p228
      %p339 = pneg %p225
      %s340 = smul.u32 16, %s19
      %p341 = scmp.lt.s32.totalorder %s340, 31
      %s342 = scalar_select %p341, %s340, 31
      %s343 = smul.addr %s342, 4
      %s344 = scalar_lea.vmem %s8, %s343
      %s345 = smul.u32 16, %s19
      %p346 = scmp.lt.s32.totalorder %s345, 31
      %s347 = scalar_select %p346, %s345, 31
      %s348 = smul.addr %s347, 8
      %s349 = scalar_lea.vmem %s0, %s348
      %s350 = smul.u32 16, %s19
      %s351 = smul.u32 16, %s19
      %p352 = scmp.lt.s32.totalorder %s351, 31
      %s353 = scalar_select %p352, %s351, 31
      %s354 = smul.addr %s353, 8
      %s355 = scalar_lea.vmem %s1, %s354
      %s356 = smul.u32 16, %s19
      %s357 = smul.u32 16, %s19
      %p358 = scmp.lt.s32.totalorder %s357, 31
      %s359 = scalar_select %p358, %s357, 31
      %s360 = smul.addr %s359, 8
      %s361 = scalar_lea.vmem %s2, %s360
      %s362 = smul.u32 16, %s19
      %s363 = smul.u32 16, %s19
      %p364 = scmp.lt.s32.totalorder %s363, 31
      %s365 = scalar_select %p364, %s363, 31
      %s366 = smul.addr %s365, 8
      %s367 = scalar_lea.vmem %s3, %s366
      %s368 = smul.u32 16, %s19
      %s369 = smul.u32 16, %s19
      %p370 = scmp.lt.s32.totalorder %s369, 31
      %s371 = scalar_select %p370, %s369, 31
      %s372 = smul.addr %s371, 4
      %s373 = scalar_lea.vmem %s8, %s372
      %s374 = smul.u32 16, %s19
      %v376 = vld [vmem:[%s355] sm:$0xff]
      %v377 = vld [vmem:[%s355 + $0x8] sm:$0xff]
      %v378 = vld [vmem:[%s355 + $0x10] sm:$0xff]
      %v379 = vld [vmem:[%s355 + $0x18] sm:$0xff]
      %v380 = vld [vmem:[%s355 + $0x20] sm:$0xff]
      %v381 = vld [vmem:[%s355 + $0x28] sm:$0xff]
      %v382 = vld [vmem:[%s355 + $0x30] sm:$0xff]
      %v383 = vld [vmem:[%s355 + $0x38] sm:$0xff]
      %v384 = vld [vmem:[%s355 + $0x40] sm:$0xff]
      %v385 = vld [vmem:[%s355 + $0x48] sm:$0xff]
      %v386 = vld [vmem:[%s355 + $0x50] sm:$0xff]
      %v387 = vld [vmem:[%s355 + $0x58] sm:$0xff]
      %v388 = vld [vmem:[%s355 + $0x60] sm:$0xff]
      %v389 = vld [vmem:[%s355 + $0x68] sm:$0xff]
      %v390 = vld [vmem:[%s355 + $0x70] sm:$0xff]
      %v391 = vld [vmem:[%s355 + $0x78] sm:$0xff]
      %v392 = vld [vmem:[%s361] sm:$0xff]
      %v393 = vld [vmem:[%s361 + $0x8] sm:$0xff]
      %v394 = vld [vmem:[%s361 + $0x10] sm:$0xff]
      %v395 = vld [vmem:[%s361 + $0x18] sm:$0xff]
      %v396 = vld [vmem:[%s361 + $0x20] sm:$0xff]
      %v397 = vld [vmem:[%s361 + $0x28] sm:$0xff]
      %v398 = vld [vmem:[%s361 + $0x30] sm:$0xff]
      %v399 = vld [vmem:[%s361 + $0x38] sm:$0xff]
      %v400 = vld [vmem:[%s361 + $0x40] sm:$0xff]
      %v401 = vld [vmem:[%s361 + $0x48] sm:$0xff]
      %v402 = vld [vmem:[%s361 + $0x50] sm:$0xff]
      %v403 = vld [vmem:[%s361 + $0x58] sm:$0xff]
      %v404 = vld [vmem:[%s361 + $0x60] sm:$0xff]
      %v405 = vld [vmem:[%s361 + $0x68] sm:$0xff]
      %v406 = vld [vmem:[%s361 + $0x70] sm:$0xff]
      %v407 = vld [vmem:[%s361 + $0x78] sm:$0xff]
      %v408 = vpack.c.bf16 %v377, %v376
      %v409 = vpack.c.bf16 %v379, %v378
      %v410 = vpack.c.bf16 %v381, %v380
      %v411 = vpack.c.bf16 %v383, %v382
      %v412 = vpack.c.bf16 %v385, %v384
      %v413 = vpack.c.bf16 %v387, %v386
      %v414 = vpack.c.bf16 %v389, %v388
      %v415 = vpack.c.bf16 %v391, %v390
      %v416 = vpack.c.bf16 %v393, %v392
      %v417 = vpack.c.bf16 %v395, %v394
      %v418 = vpack.c.bf16 %v397, %v396
      %v419 = vpack.c.bf16 %v399, %v398
      %v420 = vpack.c.bf16 %v401, %v400
      %v421 = vpack.c.bf16 %v403, %v402
      %v422 = vpack.c.bf16 %v405, %v404
      %v423 = vpack.c.bf16 %v407, %v406
      %v424 = vld [vmem:[%s4] sm:$0xff]
      %v425 = vld [vmem:[%s4 + $0x8] sm:$0xff]
      %v426 = vld [vmem:[%s4 + $0x10] sm:$0xff]
      %v427 = vld [vmem:[%s4 + $0x18] sm:$0xff]
      %v432 = vunpack.c.l.b16 %v424
      %v433 = vunpack.c.h.b16 %v424
      %v434 = vunpack.c.l.b16 %v425
      %v435 = vunpack.c.h.b16 %v425
      %v436 = vunpack.c.l.b16 %v426
      %v437 = vunpack.c.h.b16 %v426
      %v438 = vunpack.c.l.b16 %v427
      %v439 = vunpack.c.h.b16 %v427
      %v440 = vpack.c.b16 %v434, %v432
      %v441 = vpack.c.b16 %v435, %v433
      %v442 = vpack.c.b16 %v438, %v436
      %v443 = vpack.c.b16 %v439, %v437
      %vm448 = vcmask 261120
      %v450 = vsel %vm448, %v408, 0
      %v453 = vsel %vm448, %v409, 0
      %v456 = vsel %vm448, %v410, 0
      %v459 = vsel %vm448, %v411, 0
      %v462 = vsel %vm448, %v412, 0
      %v465 = vsel %vm448, %v413, 0
      %v468 = vsel %vm448, %v414, 0
      %v471 = vsel %vm448, %v415, 0
      %473 = vmatprep.subr.bf16.mxu0 %v441
      %474 = vmatpush1.bf16.msra.mxu0 %v440
      %475 = vmatprep.subr.bf16.mxu0 %v443
      %476 = vmatpush1.bf16.msra.mxu0 %v442
      %477 = vmatprep.subr.bf16.mxu0 0
      %478 = vmatpush1.bf16.msra.mxu0 0
      %479 = vmatprep.subr.bf16.mxu0 0
      %480 = vmatpush1.bf16.msra.mxu0 0
      %481 = vmatprep.subr.bf16.mxu0 0
      %482 = vmatpush1.bf16.msra.mxu0 0
      %483 = vmatprep.subr.bf16.mxu0 0
      %484 = vmatpush1.bf16.msra.mxu0 0
      %485 = vmatprep.subr.bf16.mxu0 0
      %486 = vmatpush1.bf16.msra.mxu0 0
      %487 = vmatprep.subr.bf16.mxu0 0
      %488 = vmatpush1.bf16.msra.mxu0 0
      %489 = vmatprep.subr.bf16.mxu0 0
      %490 = vmatpush1.bf16.msra.mxu0 0
      %491 = vmatprep.subr.bf16.mxu0 0
      %492 = vmatpush1.bf16.msra.mxu0 0
      %493 = vmatprep.subr.bf16.mxu0 0
      %494 = vmatpush1.bf16.msra.mxu0 0
      %495 = vmatprep.subr.bf16.mxu0 0
      %496 = vmatpush1.bf16.msra.mxu0 0
      %497 = vmatprep.subr.bf16.mxu0 0
      %498 = vmatpush1.bf16.msra.mxu0 0
      %499 = vmatprep.subr.bf16.mxu0 0
      %500 = vmatpush1.bf16.msra.mxu0 0
      %501 = vmatprep.subr.bf16.mxu0 0
      %502 = vmatpush1.bf16.msra.mxu0 0
      %503 = vmatprep.subr.bf16.mxu0 0
      %504 = vmatpush1.bf16.msra.mxu0 0
      %505 = vmatprep.mubr.bf16.mxu0 0
      %506 = vmatmul.mubr.bf16.gmra.mrb[0].mxu0 %v450
      %v507 = vpop.f32.mrb[0].mxu0
      %v508 = vadd.f32 0.0, %v507
      %v509 = vpop.f32.mrb[0].mxu0
      %v510 = vadd.f32 0.0, %v509
      %v511 = vpop.f32.mrb[0].mxu0
      %v512 = vadd.f32 0.0, %v511
      %v513 = vpop.f32.mrb[0].mxu0
      %v514 = vadd.f32 0.0, %v513
      %515 = vmatprep.mubr.bf16.mxu0 0
      %516 = vmatmul.mubr.bf16.gmra.mrb[0].mxu0 %v453
      %v517 = vpop.f32.mrb[0].mxu0
      %v518 = vadd.f32 0.0, %v517
      %v519 = vpop.f32.mrb[0].mxu0
      %v520 = vadd.f32 0.0, %v519
      %v521 = vpop.f32.mrb[0].mxu0
      %v522 = vadd.f32 0.0, %v521
      %v523 = vpop.f32.mrb[0].mxu0
      %v524 = vadd.f32 0.0, %v523
      %525 = vmatprep.mubr.bf16.mxu0 0
      %526 = vmatmul.mubr.bf16.gmra.mrb[0].mxu0 %v456
      %v527 = vpop.f32.mrb[0].mxu0
      %v528 = vadd.f32 0.0, %v527
      %v529 = vpop.f32.mrb[0].mxu0
      %v530 = vadd.f32 0.0, %v529
      %v531 = vpop.f32.mrb[0].mxu0
      %v532 = vadd.f32 0.0, %v531
      %v533 = vpop.f32.mrb[0].mxu0
      %v534 = vadd.f32 0.0, %v533
      %535 = vmatprep.mubr.bf16.mxu0 0
      %536 = vmatmul.mubr.bf16.gmra.mrb[0].mxu0 %v459
      %v537 = vpop.f32.mrb[0].mxu0
      %v538 = vadd.f32 0.0, %v537
      %v539 = vpop.f32.mrb[0].mxu0
      %v540 = vadd.f32 0.0, %v539
      %v541 = vpop.f32.mrb[0].mxu0
      %v542 = vadd.f32 0.0, %v541
      %v543 = vpop.f32.mrb[0].mxu0
      %v544 = vadd.f32 0.0, %v543
      %545 = vmatprep.mubr.bf16.mxu0 0
      %546 = vmatmul.mubr.bf16.gmra.mrb[0].mxu0 %v462
      %v547 = vpop.f32.mrb[0].mxu0
      %v548 = vadd.f32 0.0, %v547
      %v549 = vpop.f32.mrb[0].mxu0
      %v550 = vadd.f32 0.0, %v549
      %v551 = vpop.f32.mrb[0].mxu0
      %v552 = vadd.f32 0.0, %v551
      %v553 = vpop.f32.mrb[0].mxu0
      %v554 = vadd.f32 0.0, %v553
      %555 = vmatprep.mubr.bf16.mxu0 0
      %556 = vmatmul.mubr.bf16.gmra.mrb[0].mxu0 %v465
      %v557 = vpop.f32.mrb[0].mxu0
      %v558 = vadd.f32 0.0, %v557
      %v559 = vpop.f32.mrb[0].mxu0
      %v560 = vadd.f32 0.0, %v559
      %v561 = vpop.f32.mrb[0].mxu0
      %v562 = vadd.f32 0.0, %v561
      %v563 = vpop.f32.mrb[0].mxu0
      %v564 = vadd.f32 0.0, %v563
      %565 = vmatprep.mubr.bf16.mxu0 0
      %566 = vmatmul.mubr.bf16.gmra.mrb[0].mxu0 %v468
      %v567 = vpop.f32.mrb[0].mxu0
      %v568 = vadd.f32 0.0, %v567
      %v569 = vpop.f32.mrb[0].mxu0
      %v570 = vadd.f32 0.0, %v569
      %v571 = vpop.f32.mrb[0].mxu0
      %v572 = vadd.f32 0.0, %v571
      %v573 = vpop.f32.mrb[0].mxu0
      %v574 = vadd.f32 0.0, %v573
      %575 = vmatprep.mubr.bf16.mxu0 0
      %576 = vmatmul.mubr.bf16.gmra.mrb[0].mxu0 %v471
      %v577 = vpop.f32.mrb[0].mxu0
      %v578 = vadd.f32 0.0, %v577
      %v579 = vpop.f32.mrb[0].mxu0
      %v580 = vadd.f32 0.0, %v579
      %v581 = vpop.f32.mrb[0].mxu0
      %v582 = vadd.f32 0.0, %v581
      %v583 = vpop.f32.mrb[0].mxu0
      %v584 = vadd.f32 0.0, %v583
      %585 = vdwg.mxu0
      %594 = vrot.lane.b32.xlu0 %v416, 32
      %v595 = vpop.permute.xlu0 %594
      %596 = vrot.lane.b32.xlu0 %v417, 32
      %v597 = vpop.permute.xlu0 %596
      %598 = vrot.lane.b32.xlu0 %v418, 32
      %v599 = vpop.permute.xlu0 %598
      %600 = vrot.lane.b32.xlu0 %v419, 32
      %v601 = vpop.permute.xlu0 %600
      %602 = vrot.lane.b32.xlu0 %v420, 32
      %v603 = vpop.permute.xlu0 %602
      %604 = vrot.lane.b32.xlu0 %v421, 32
      %v605 = vpop.permute.xlu0 %604
      %606 = vrot.lane.b32.xlu0 %v422, 32
      %v607 = vpop.permute.xlu0 %606
      %608 = vrot.lane.b32.xlu0 %v423, 32
      %v609 = vpop.permute.xlu0 %608
      %610 = vrot.lane.b32.xlu0 %v416, 64
      %v611 = vpop.permute.xlu0 %610
      %612 = vrot.lane.b32.xlu0 %v417, 64
      %v613 = vpop.permute.xlu0 %612
      %614 = vrot.lane.b32.xlu0 %v418, 64
      %v615 = vpop.permute.xlu0 %614
      %616 = vrot.lane.b32.xlu0 %v419, 64
      %v617 = vpop.permute.xlu0 %616
      %618 = vrot.lane.b32.xlu0 %v420, 64
      %v619 = vpop.permute.xlu0 %618
      %620 = vrot.lane.b32.xlu0 %v421, 64
      %v621 = vpop.permute.xlu0 %620
      %622 = vrot.lane.b32.xlu0 %v422, 64
      %v623 = vpop.permute.xlu0 %622
      %624 = vrot.lane.b32.xlu0 %v423, 64
      %v625 = vpop.permute.xlu0 %624
      %626 = vrot.lane.b32.xlu0 %v416, 96
      %v627 = vpop.permute.xlu0 %626
      %628 = vrot.lane.b32.xlu0 %v417, 96
      %v629 = vpop.permute.xlu0 %628
      %630 = vrot.lane.b32.xlu0 %v418, 96
      %v631 = vpop.permute.xlu0 %630
      %632 = vrot.lane.b32.xlu0 %v419, 96
      %v633 = vpop.permute.xlu0 %632
      %634 = vrot.lane.b32.xlu0 %v420, 96
      %v635 = vpop.permute.xlu0 %634
      %636 = vrot.lane.b32.xlu0 %v421, 96
      %v637 = vpop.permute.xlu0 %636
      %638 = vrot.lane.b32.xlu0 %v422, 96
      %v639 = vpop.permute.xlu0 %638
      %640 = vrot.lane.b32.xlu0 %v423, 96
      %v641 = vpop.permute.xlu0 %640
      %v644 = vsel %vm448, %v416, %v595
      %v647 = vsel %vm448, %v417, %v597
      %v650 = vsel %vm448, %v418, %v599
      %v653 = vsel %vm448, %v419, %v601
      %v656 = vsel %vm448, %v420, %v603
      %v659 = vsel %vm448, %v421, %v605
      %v662 = vsel %vm448, %v422, %v607
      %v665 = vsel %vm448, %v423, %v609
      %vm666 = vcmask 523264
      %v668 = vsel %vm666, %v644, %v611
      %v670 = vsel %vm666, %v647, %v613
      %v672 = vsel %vm666, %v650, %v615
      %v674 = vsel %vm666, %v653, %v617
      %v676 = vsel %vm666, %v656, %v619
      %v678 = vsel %vm666, %v659, %v621
      %v680 = vsel %vm666, %v662, %v623
      %v682 = vsel %vm666, %v665, %v625
      %vm683 = vcmask 785408
      %v685 = vsel %vm683, %v668, %v627
      %v688 = vsel %vm683, %v670, %v629
      %v691 = vsel %vm683, %v672, %v631
      %v694 = vsel %vm683, %v674, %v633
      %v697 = vsel %vm683, %v676, %v635
      %v700 = vsel %vm683, %v678, %v637
      %v703 = vsel %vm683, %v680, %v639
      %v706 = vsel %vm683, %v682, %v641
      %v708 = vpack.c.bf16 %v512, %v508
      %v709 = vpack.c.bf16 %v514, %v510
      %v710 = vpack.c.bf16 %v522, %v518
      %v711 = vpack.c.bf16 %v524, %v520
      %v712 = vpack.c.bf16 %v532, %v528
      %v713 = vpack.c.bf16 %v534, %v530
      %v714 = vpack.c.bf16 %v542, %v538
      %v715 = vpack.c.bf16 %v544, %v540
      %v716 = vpack.c.bf16 %v552, %v548
      %v717 = vpack.c.bf16 %v554, %v550
      %v718 = vpack.c.bf16 %v562, %v558
      %v719 = vpack.c.bf16 %v564, %v560
      %v720 = vpack.c.bf16 %v572, %v568
      %v721 = vpack.c.bf16 %v574, %v570
      %v722 = vpack.c.bf16 %v582, %v578
      %v723 = vpack.c.bf16 %v584, %v580
      %v724 = vmul.bf16 %v708, %v685
      %v725 = vmul.bf16 %v709, %v685
      %v726 = vmul.bf16 %v710, %v688
      %v727 = vmul.bf16 %v711, %v688
      %v728 = vmul.bf16 %v712, %v691
      %v729 = vmul.bf16 %v713, %v691
      %v730 = vmul.bf16 %v714, %v694
      %v731 = vmul.bf16 %v715, %v694
      %v732 = vmul.bf16 %v716, %v697
      %v733 = vmul.bf16 %v717, %v697
      %v734 = vmul.bf16 %v718, %v700
      %v735 = vmul.bf16 %v719, %v700
      %v736 = vmul.bf16 %v720, %v703
      %v737 = vmul.bf16 %v721, %v703
      %v738 = vmul.bf16 %v722, %v706
      %v739 = vmul.bf16 %v723, %v706
      %v740 = vld [vmem:[%s5] sm:$0xf]
      %v741 = vld [vmem:[%s5 + $0x4] sm:$0xf]
      %v742 = vld [vmem:[%s5 + $0x8] sm:$0xf]
      %v743 = vld [vmem:[%s5 + $0xc] sm:$0xf]
      %v744 = vld [vmem:[%s5 + $0x10] sm:$0xf]
      %v745 = vld [vmem:[%s5 + $0x14] sm:$0xf]
      %v746 = vld [vmem:[%s5 + $0x18] sm:$0xf]
      %v747 = vld [vmem:[%s5 + $0x1c] sm:$0xf]
      %v748 = vld [vmem:[%s5 + $0x20] sm:$0xf]
      %v749 = vld [vmem:[%s5 + $0x24] sm:$0xf]
      %v750 = vld [vmem:[%s5 + $0x28] sm:$0xf]
      %v751 = vld [vmem:[%s5 + $0x2c] sm:$0xf]
      %v752 = vld [vmem:[%s5 + $0x30] sm:$0xf]
      %v753 = vld [vmem:[%s5 + $0x34] sm:$0xf]
      %v754 = vld [vmem:[%s5 + $0x38] sm:$0xf]
      %v755 = vld [vmem:[%s5 + $0x3c] sm:$0xf]
      %v756 = vld [vmem:[%s5 + $0x40] sm:$0xf]
      %v757 = vld [vmem:[%s5 + $0x44] sm:$0xf]
      %v758 = vld [vmem:[%s5 + $0x48] sm:$0xf]
      %v759 = vld [vmem:[%s5 + $0x4c] sm:$0xf]
      %v760 = vld [vmem:[%s5 + $0x50] sm:$0xf]
      %v761 = vld [vmem:[%s5 + $0x54] sm:$0xf]
      %v762 = vld [vmem:[%s5 + $0x58] sm:$0xf]
      %v763 = vld [vmem:[%s5 + $0x5c] sm:$0xf]
      %v764 = vld [vmem:[%s5 + $0x60] sm:$0xf]
      %v765 = vld [vmem:[%s5 + $0x64] sm:$0xf]
      %v766 = vld [vmem:[%s5 + $0x68] sm:$0xf]
      %v767 = vld [vmem:[%s5 + $0x6c] sm:$0xf]
      %v768 = vld [vmem:[%s5 + $0x70] sm:$0xf]
      %v769 = vld [vmem:[%s5 + $0x74] sm:$0xf]
      %v770 = vld [vmem:[%s5 + $0x78] sm:$0xf]
      %v771 = vld [vmem:[%s5 + $0x7c] sm:$0xf]
      %v772 = vld [vmem:[%s6] sm:$0x1]
      %v774 = vlaneseq
      %v775 = vshrl.u32 %v774, 7
      %v776 = vsub.s32 0, %v775
      %v777 = vrot.slane %v772, %v776
      %v811 = vunpack.c.l.b16 %v740
      %v812 = vunpack.c.l.b16 %v741
      %v813 = vunpack.c.l.b16 %v742
      %v814 = vunpack.c.l.b16 %v743
      %v815 = vunpack.c.l.b16 %v744
      %v816 = vunpack.c.l.b16 %v745
      %v817 = vunpack.c.l.b16 %v746
      %v818 = vunpack.c.l.b16 %v747
      %v819 = vunpack.c.l.b16 %v748
      %v820 = vunpack.c.l.b16 %v749
      %v821 = vunpack.c.l.b16 %v750
      %v822 = vunpack.c.l.b16 %v751
      %v823 = vunpack.c.l.b16 %v752
      %v824 = vunpack.c.l.b16 %v753
      %v825 = vunpack.c.l.b16 %v754
      %v826 = vunpack.c.l.b16 %v755
      %v827 = vunpack.c.l.b16 %v756
      %v828 = vunpack.c.l.b16 %v757
      %v829 = vunpack.c.l.b16 %v758
      %v830 = vunpack.c.l.b16 %v759
      %v831 = vunpack.c.l.b16 %v760
      %v832 = vunpack.c.l.b16 %v761
      %v833 = vunpack.c.l.b16 %v762
      %v834 = vunpack.c.l.b16 %v763
      %v835 = vunpack.c.l.b16 %v764
      %v836 = vunpack.c.l.b16 %v765
      %v837 = vunpack.c.l.b16 %v766
      %v838 = vunpack.c.l.b16 %v767
      %v839 = vunpack.c.l.b16 %v768
      %v840 = vunpack.c.l.b16 %v769
      %v841 = vunpack.c.l.b16 %v770
      %v842 = vunpack.c.l.b16 %v771
      %v843 = vpack.c.b16 %v812, %v811
      %v844 = vpack.c.b16 %v814, %v813
      %v845 = vpack.c.b16 %v816, %v815
      %v846 = vpack.c.b16 %v818, %v817
      %v847 = vpack.c.b16 %v820, %v819
      %v848 = vpack.c.b16 %v822, %v821
      %v849 = vpack.c.b16 %v824, %v823
      %v850 = vpack.c.b16 %v826, %v825
      %v851 = vpack.c.b16 %v828, %v827
      %v852 = vpack.c.b16 %v830, %v829
      %v853 = vpack.c.b16 %v832, %v831
      %v854 = vpack.c.b16 %v834, %v833
      %v855 = vpack.c.b16 %v836, %v835
      %v856 = vpack.c.b16 %v838, %v837
      %v857 = vpack.c.b16 %v840, %v839
      %v858 = vpack.c.b16 %v842, %v841
      %875 = vmatprep.subr.bf16.mxu0 0
      %876 = vmatpush1.bf16.msra.mxu0 %v843
      %877 = vmatprep.subr.bf16.mxu0 0
      %878 = vmatpush1.bf16.msra.mxu0 %v844
      %879 = vmatprep.subr.bf16.mxu0 0
      %880 = vmatpush1.bf16.msra.mxu0 %v845
      %881 = vmatprep.subr.bf16.mxu0 0
      %882 = vmatpush1.bf16.msra.mxu0 %v846
      %883 = vmatprep.subr.bf16.mxu0 0
      %884 = vmatpush1.bf16.msra.mxu0 %v847
      %885 = vmatprep.subr.bf16.mxu0 0
      %886 = vmatpush1.bf16.msra.mxu0 %v848
      %887 = vmatprep.subr.bf16.mxu0 0
      %888 = vmatpush1.bf16.msra.mxu0 %v849
      %889 = vmatprep.subr.bf16.mxu0 0
      %890 = vmatpush1.bf16.msra.mxu0 %v850
      %891 = vmatprep.subr.bf16.mxu0 0
      %892 = vmatpush1.bf16.msra.mxu0 %v851
      %893 = vmatprep.subr.bf16.mxu0 0
      %894 = vmatpush1.bf16.msra.mxu0 %v852
      %895 = vmatprep.subr.bf16.mxu0 0
      %896 = vmatpush1.bf16.msra.mxu0 %v853
      %897 = vmatprep.subr.bf16.mxu0 0
      %898 = vmatpush1.bf16.msra.mxu0 %v854
      %899 = vmatprep.subr.bf16.mxu0 0
      %900 = vmatpush1.bf16.msra.mxu0 %v855
      %901 = vmatprep.subr.bf16.mxu0 0
      %902 = vmatpush1.bf16.msra.mxu0 %v856
      %903 = vmatprep.subr.bf16.mxu0 0
      %904 = vmatpush1.bf16.msra.mxu0 %v857
      %905 = vmatprep.subr.bf16.mxu0 0
      %906 = vmatpush1.bf16.msra.mxu0 %v858
      %907 = vmatprep.mubr.bf16.mxu0 %v725
      %908 = vmatmul.mubr.bf16.gmra.mrb[0].mxu0 %v724
      %v909 = vpop.f32.mrb[0].mxu0
      %v910 = vadd.f32 %v777, %v909
      %v911 = vpop.f32.mrb[0].mxu0
      %v912 = vpop.f32.mrb[0].mxu0
      %v913 = vadd.f32 %v777, %v912
      %v914 = vpop.f32.mrb[0].mxu0
      %915 = vmatprep.mubr.bf16.mxu0 %v727
      %916 = vmatmul.mubr.bf16.gmra.mrb[0].mxu0 %v726
      %v917 = vpop.f32.mrb[0].mxu0
      %v918 = vadd.f32 %v777, %v917
      %v919 = vpop.f32.mrb[0].mxu0
      %v920 = vpop.f32.mrb[0].mxu0
      %v921 = vadd.f32 %v777, %v920
      %v922 = vpop.f32.mrb[0].mxu0
      %923 = vmatprep.mubr.bf16.mxu0 %v729
      %924 = vmatmul.mubr.bf16.gmra.mrb[0].mxu0 %v728
      %v925 = vpop.f32.mrb[0].mxu0
      %v926 = vadd.f32 %v777, %v925
      %v927 = vpop.f32.mrb[0].mxu0
      %v928 = vpop.f32.mrb[0].mxu0
      %v929 = vadd.f32 %v777, %v928
      %v930 = vpop.f32.mrb[0].mxu0
      %931 = vmatprep.mubr.bf16.mxu0 %v731
      %932 = vmatmul.mubr.bf16.gmra.mrb[0].mxu0 %v730
      %v933 = vpop.f32.mrb[0].mxu0
      %v934 = vadd.f32 %v777, %v933
      %v935 = vpop.f32.mrb[0].mxu0
      %v936 = vpop.f32.mrb[0].mxu0
      %v937 = vadd.f32 %v777, %v936
      %v938 = vpop.f32.mrb[0].mxu0
      %939 = vmatprep.mubr.bf16.mxu0 %v733
      %940 = vmatmul.mubr.bf16.gmra.mrb[0].mxu0 %v732
      %v941 = vpop.f32.mrb[0].mxu0
      %v942 = vadd.f32 %v777, %v941
      %v943 = vpop.f32.mrb[0].mxu0
      %v944 = vpop.f32.mrb[0].mxu0
      %v945 = vadd.f32 %v777, %v944
      %v946 = vpop.f32.mrb[0].mxu0
      %947 = vmatprep.mubr.bf16.mxu0 %v735
      %948 = vmatmul.mubr.bf16.gmra.mrb[0].mxu0 %v734
      %v949 = vpop.f32.mrb[0].mxu0
      %v950 = vadd.f32 %v777, %v949
      %v951 = vpop.f32.mrb[0].mxu0
      %v952 = vpop.f32.mrb[0].mxu0
      %v953 = vadd.f32 %v777, %v952
      %v954 = vpop.f32.mrb[0].mxu0
      %955 = vmatprep.mubr.bf16.mxu0 %v737
      %956 = vmatmul.mubr.bf16.gmra.mrb[0].mxu0 %v736
      %v957 = vpop.f32.mrb[0].mxu0
      %v958 = vadd.f32 %v777, %v957
      %v959 = vpop.f32.mrb[0].mxu0
      %v960 = vpop.f32.mrb[0].mxu0
      %v961 = vadd.f32 %v777, %v960
      %v962 = vpop.f32.mrb[0].mxu0
      %963 = vmatprep.mubr.bf16.mxu0 %v739
      %964 = vmatmul.mubr.bf16.gmra.mrb[0].mxu0 %v738
      %v965 = vpop.f32.mrb[0].mxu0
      %v966 = vadd.f32 %v777, %v965
      %v967 = vpop.f32.mrb[0].mxu0
      %v968 = vpop.f32.mrb[0].mxu0
      %v969 = vadd.f32 %v777, %v968
      %v970 = vpop.f32.mrb[0].mxu0
      %971 = vdwg.mxu0
      %v972 = vld [vmem:[%s367] sm:$0xff]
      %v973 = vld [vmem:[%s367 + $0x8] sm:$0xff]
      %v974 = vld [vmem:[%s367 + $0x10] sm:$0xff]
      %v975 = vld [vmem:[%s367 + $0x18] sm:$0xff]
      %v976 = vld [vmem:[%s367 + $0x20] sm:$0xff]
      %v977 = vld [vmem:[%s367 + $0x28] sm:$0xff]
      %v978 = vld [vmem:[%s367 + $0x30] sm:$0xff]
      %v979 = vld [vmem:[%s367 + $0x38] sm:$0xff]
      %v980 = vld [vmem:[%s367 + $0x40] sm:$0xff]
      %v981 = vld [vmem:[%s367 + $0x48] sm:$0xff]
      %v982 = vld [vmem:[%s367 + $0x50] sm:$0xff]
      %v983 = vld [vmem:[%s367 + $0x58] sm:$0xff]
      %v984 = vld [vmem:[%s367 + $0x60] sm:$0xff]
      %v985 = vld [vmem:[%s367 + $0x68] sm:$0xff]
      %v986 = vld [vmem:[%s367 + $0x70] sm:$0xff]
      %v987 = vld [vmem:[%s367 + $0x78] sm:$0xff]
      %1004 = vrot.lane.b32.xlu0 %v392, 32
      %v1005 = vpop.permute.xlu0 %1004
      %1006 = vrot.lane.b32.xlu0 %v393, 32
      %v1007 = vpop.permute.xlu0 %1006
      %1008 = vrot.lane.b32.xlu0 %v394, 32
      %v1009 = vpop.permute.xlu0 %1008
      %1010 = vrot.lane.b32.xlu0 %v395, 32
      %v1011 = vpop.permute.xlu0 %1010
      %1012 = vrot.lane.b32.xlu0 %v396, 32
      %v1013 = vpop.permute.xlu0 %1012
      %1014 = vrot.lane.b32.xlu0 %v397, 32
      %v1015 = vpop.permute.xlu0 %1014
      %1016 = vrot.lane.b32.xlu0 %v398, 32
      %v1017 = vpop.permute.xlu0 %1016
      %1018 = vrot.lane.b32.xlu0 %v399, 32
      %v1019 = vpop.permute.xlu0 %1018
      %1020 = vrot.lane.b32.xlu0 %v400, 32
      %v1021 = vpop.permute.xlu0 %1020
      %1022 = vrot.lane.b32.xlu0 %v401, 32
      %v1023 = vpop.permute.xlu0 %1022
      %1024 = vrot.lane.b32.xlu0 %v402, 32
      %v1025 = vpop.permute.xlu0 %1024
      %1026 = vrot.lane.b32.xlu0 %v403, 32
      %v1027 = vpop.permute.xlu0 %1026
      %1028 = vrot.lane.b32.xlu0 %v404, 32
      %v1029 = vpop.permute.xlu0 %1028
      %1030 = vrot.lane.b32.xlu0 %v405, 32
      %v1031 = vpop.permute.xlu0 %1030
      %1032 = vrot.lane.b32.xlu0 %v406, 32
      %v1033 = vpop.permute.xlu0 %1032
      %1034 = vrot.lane.b32.xlu0 %v407, 32
      %v1035 = vpop.permute.xlu0 %1034
      %1068 = vrot.lane.b32.xlu0 %v972, 64
      %v1069 = vpop.permute.xlu0 %1068
      %1070 = vrot.lane.b32.xlu0 %v973, 64
      %v1071 = vpop.permute.xlu0 %1070
      %1072 = vrot.lane.b32.xlu0 %v974, 64
      %v1073 = vpop.permute.xlu0 %1072
      %1074 = vrot.lane.b32.xlu0 %v975, 64
      %v1075 = vpop.permute.xlu0 %1074
      %1076 = vrot.lane.b32.xlu0 %v976, 64
      %v1077 = vpop.permute.xlu0 %1076
      %1078 = vrot.lane.b32.xlu0 %v977, 64
      %v1079 = vpop.permute.xlu0 %1078
      %1080 = vrot.lane.b32.xlu0 %v978, 64
      %v1081 = vpop.permute.xlu0 %1080
      %1082 = vrot.lane.b32.xlu0 %v979, 64
      %v1083 = vpop.permute.xlu0 %1082
      %1084 = vrot.lane.b32.xlu0 %v980, 64
      %v1085 = vpop.permute.xlu0 %1084
      %1086 = vrot.lane.b32.xlu0 %v981, 64
      %v1087 = vpop.permute.xlu0 %1086
      %1088 = vrot.lane.b32.xlu0 %v982, 64
      %v1089 = vpop.permute.xlu0 %1088
      %1090 = vrot.lane.b32.xlu0 %v983, 64
      %v1091 = vpop.permute.xlu0 %1090
      %1092 = vrot.lane.b32.xlu0 %v984, 64
      %v1093 = vpop.permute.xlu0 %1092
      %1094 = vrot.lane.b32.xlu0 %v985, 64
      %v1095 = vpop.permute.xlu0 %1094
      %1096 = vrot.lane.b32.xlu0 %v986, 64
      %v1097 = vpop.permute.xlu0 %1096
      %1098 = vrot.lane.b32.xlu0 %v987, 64
      %v1099 = vpop.permute.xlu0 %1098
      %v1116 = vsel %vm448, %v376, %v1005
      %v1117 = vsel %vm448, %v377, %v1007
      %v1118 = vsel %vm448, %v378, %v1009
      %v1119 = vsel %vm448, %v379, %v1011
      %v1120 = vsel %vm448, %v380, %v1013
      %v1121 = vsel %vm448, %v381, %v1015
      %v1122 = vsel %vm448, %v382, %v1017
      %v1123 = vsel %vm448, %v383, %v1019
      %v1124 = vsel %vm448, %v384, %v1021
      %v1125 = vsel %vm448, %v385, %v1023
      %v1126 = vsel %vm448, %v386, %v1025
      %v1127 = vsel %vm448, %v387, %v1027
      %v1128 = vsel %vm448, %v388, %v1029
      %v1129 = vsel %vm448, %v389, %v1031
      %v1130 = vsel %vm448, %v390, %v1033
      %v1131 = vsel %vm448, %v391, %v1035
      %v1132 = vsel %vm666, %v1116, %v1069
      %v1133 = vsel %vm666, %v1117, %v1071
      %v1134 = vsel %vm666, %v1118, %v1073
      %v1135 = vsel %vm666, %v1119, %v1075
      %v1136 = vsel %vm666, %v1120, %v1077
      %v1137 = vsel %vm666, %v1121, %v1079
      %v1138 = vsel %vm666, %v1122, %v1081
      %v1139 = vsel %vm666, %v1123, %v1083
      %v1140 = vsel %vm666, %v1124, %v1085
      %v1141 = vsel %vm666, %v1125, %v1087
      %v1142 = vsel %vm666, %v1126, %v1089
      %v1143 = vsel %vm666, %v1127, %v1091
      %v1144 = vsel %vm666, %v1128, %v1093
      %v1145 = vsel %vm666, %v1129, %v1095
      %v1146 = vsel %vm666, %v1130, %v1097
      %v1147 = vsel %vm666, %v1131, %v1099
      %v1148 = vld [vmem:[%s349] sm:$0xff]
      %v1149 = vld [vmem:[%s349 + $0x8] sm:$0xff]
      %v1150 = vld [vmem:[%s349 + $0x10] sm:$0xff]
      %v1151 = vld [vmem:[%s349 + $0x18] sm:$0xff]
      %v1152 = vld [vmem:[%s349 + $0x20] sm:$0xff]
      %v1153 = vld [vmem:[%s349 + $0x28] sm:$0xff]
      %v1154 = vld [vmem:[%s349 + $0x30] sm:$0xff]
      %v1155 = vld [vmem:[%s349 + $0x38] sm:$0xff]
      %v1156 = vld [vmem:[%s349 + $0x40] sm:$0xff]
      %v1157 = vld [vmem:[%s349 + $0x48] sm:$0xff]
      %v1158 = vld [vmem:[%s349 + $0x50] sm:$0xff]
      %v1159 = vld [vmem:[%s349 + $0x58] sm:$0xff]
      %v1160 = vld [vmem:[%s349 + $0x60] sm:$0xff]
      %v1161 = vld [vmem:[%s349 + $0x68] sm:$0xff]
      %v1162 = vld [vmem:[%s349 + $0x70] sm:$0xff]
      %v1163 = vld [vmem:[%s349 + $0x78] sm:$0xff]
      %v1164 = vmul.f32 %v1148, %v1132
      %v1165 = vmul.f32 %v1149, %v1133
      %v1166 = vmul.f32 %v1150, %v1134
      %v1167 = vmul.f32 %v1151, %v1135
      %v1168 = vmul.f32 %v1152, %v1136
      %v1169 = vmul.f32 %v1153, %v1137
      %v1170 = vmul.f32 %v1154, %v1138
      %v1171 = vmul.f32 %v1155, %v1139
      %v1172 = vmul.f32 %v1156, %v1140
      %v1173 = vmul.f32 %v1157, %v1141
      %v1174 = vmul.f32 %v1158, %v1142
      %v1175 = vmul.f32 %v1159, %v1143
      %v1176 = vmul.f32 %v1160, %v1144
      %v1177 = vmul.f32 %v1161, %v1145
      %v1178 = vmul.f32 %v1162, %v1146
      %v1179 = vmul.f32 %v1163, %v1147
      %v1180 = vpack.c.bf16 %v1165, %v1164
      %v1181 = vpack.c.bf16 %v1167, %v1166
      %v1182 = vpack.c.bf16 %v1169, %v1168
      %v1183 = vpack.c.bf16 %v1171, %v1170
      %v1184 = vpack.c.bf16 %v1173, %v1172
      %v1185 = vpack.c.bf16 %v1175, %v1174
      %v1186 = vpack.c.bf16 %v1177, %v1176
      %v1187 = vpack.c.bf16 %v1179, %v1178
      %v1188 = vld [vmem:[%s7] sm:$0xf]
      %v1189 = vld [vmem:[%s7 + $0x4] sm:$0xf]
      %v1190 = vld [vmem:[%s7 + $0x8] sm:$0xf]
      %v1191 = vld [vmem:[%s7 + $0xc] sm:$0xf]
      %v1192 = vld [vmem:[%s7 + $0x10] sm:$0xf]
      %v1193 = vld [vmem:[%s7 + $0x14] sm:$0xf]
      %v1194 = vld [vmem:[%s7 + $0x18] sm:$0xf]
      %v1195 = vld [vmem:[%s7 + $0x1c] sm:$0xf]
      %v1196 = vld [vmem:[%s7 + $0x20] sm:$0xf]
      %v1197 = vld [vmem:[%s7 + $0x24] sm:$0xf]
      %v1208 = vunpack.c.l.b16 %v1188
      %v1209 = vunpack.c.l.b16 %v1189
      %v1210 = vunpack.c.l.b16 %v1190
      %v1211 = vunpack.c.l.b16 %v1191
      %v1212 = vunpack.c.l.b16 %v1192
      %v1213 = vunpack.c.l.b16 %v1193
      %v1214 = vunpack.c.l.b16 %v1194
      %v1215 = vunpack.c.l.b16 %v1195
      %v1216 = vunpack.c.l.b16 %v1196
      %v1217 = vunpack.c.l.b16 %v1197
      %v1218 = vpack.c.b16 %v1209, %v1208
      %v1219 = vpack.c.b16 %v1211, %v1210
      %v1220 = vpack.c.b16 %v1213, %v1212
      %v1221 = vpack.c.b16 %v1215, %v1214
      %v1222 = vpack.c.b16 %v1217, %v1216
      %vm1228 = vcmask 654336
      %v1230 = vsel %vm1228, %v1180, 0
      %v1233 = vsel %vm1228, %v1181, 0
      %v1236 = vsel %vm1228, %v1182, 0
      %v1239 = vsel %vm1228, %v1183, 0
      %v1242 = vsel %vm1228, %v1184, 0
      %v1245 = vsel %vm1228, %v1185, 0
      %v1248 = vsel %vm1228, %v1186, 0
      %v1251 = vsel %vm1228, %v1187, 0
      %1253 = vmatprep.subr.bf16.mxu0 0
      %1254 = vmatpush1.bf16.msra.mxu0 %v1218
      %1255 = vmatprep.subr.bf16.mxu0 0
      %1256 = vmatpush1.bf16.msra.mxu0 %v1219
      %1257 = vmatprep.subr.bf16.mxu0 0
      %1258 = vmatpush1.bf16.msra.mxu0 %v1220
      %1259 = vmatprep.subr.bf16.mxu0 0
      %1260 = vmatpush1.bf16.msra.mxu0 %v1221
      %1261 = vmatprep.subr.bf16.mxu0 0
      %1262 = vmatpush1.bf16.msra.mxu0 %v1222
      %1263 = vmatprep.subr.bf16.mxu0 0
      %1264 = vmatpush1.bf16.msra.mxu0 0
      %1265 = vmatprep.subr.bf16.mxu0 0
      %1266 = vmatpush1.bf16.msra.mxu0 0
      %1267 = vmatprep.subr.bf16.mxu0 0
      %1268 = vmatpush1.bf16.msra.mxu0 0
      %1269 = vmatprep.subr.bf16.mxu0 0
      %1270 = vmatpush1.bf16.msra.mxu0 0
      %1271 = vmatprep.subr.bf16.mxu0 0
      %1272 = vmatpush1.bf16.msra.mxu0 0
      %1273 = vmatprep.subr.bf16.mxu0 0
      %1274 = vmatpush1.bf16.msra.mxu0 0
      %1275 = vmatprep.subr.bf16.mxu0 0
      %1276 = vmatpush1.bf16.msra.mxu0 0
      %1277 = vmatprep.subr.bf16.mxu0 0
      %1278 = vmatpush1.bf16.msra.mxu0 0
      %1279 = vmatprep.subr.bf16.mxu0 0
      %1280 = vmatpush1.bf16.msra.mxu0 0
      %1281 = vmatprep.subr.bf16.mxu0 0
      %1282 = vmatpush1.bf16.msra.mxu0 0
      %1283 = vmatprep.subr.bf16.mxu0 0
      %1284 = vmatpush1.bf16.msra.mxu0 0
      %1285 = vmatprep.mubr.bf16.mxu0 0
      %1286 = vmatmul.mubr.bf16.gmra.mrb[0].mxu0 %v1230
      %v1287 = vpop.f32.mrb[0].mxu0
      %v1288 = vadd.f32 0.0, %v1287
      %v1289 = vpop.f32.mrb[0].mxu0
      %v1290 = vpop.f32.mrb[0].mxu0
      %v1291 = vadd.f32 0.0, %v1290
      %v1292 = vpop.f32.mrb[0].mxu0
      %1293 = vmatprep.mubr.bf16.mxu0 0
      %1294 = vmatmul.mubr.bf16.gmra.mrb[0].mxu0 %v1233
      %v1295 = vpop.f32.mrb[0].mxu0
      %v1296 = vadd.f32 0.0, %v1295
      %v1297 = vpop.f32.mrb[0].mxu0
      %v1298 = vpop.f32.mrb[0].mxu0
      %v1299 = vadd.f32 0.0, %v1298
      %v1300 = vpop.f32.mrb[0].mxu0
      %1301 = vmatprep.mubr.bf16.mxu0 0
      %1302 = vmatmul.mubr.bf16.gmra.mrb[0].mxu0 %v1236
      %v1303 = vpop.f32.mrb[0].mxu0
      %v1304 = vadd.f32 0.0, %v1303
      %v1305 = vpop.f32.mrb[0].mxu0
      %v1306 = vpop.f32.mrb[0].mxu0
      %v1307 = vadd.f32 0.0, %v1306
      %v1308 = vpop.f32.mrb[0].mxu0
      %1309 = vmatprep.mubr.bf16.mxu0 0
      %1310 = vmatmul.mubr.bf16.gmra.mrb[0].mxu0 %v1239
      %v1311 = vpop.f32.mrb[0].mxu0
      %v1312 = vadd.f32 0.0, %v1311
      %v1313 = vpop.f32.mrb[0].mxu0
      %v1314 = vpop.f32.mrb[0].mxu0
      %v1315 = vadd.f32 0.0, %v1314
      %v1316 = vpop.f32.mrb[0].mxu0
      %1317 = vmatprep.mubr.bf16.mxu0 0
      %1318 = vmatmul.mubr.bf16.gmra.mrb[0].mxu0 %v1242
      %v1319 = vpop.f32.mrb[0].mxu0
      %v1320 = vadd.f32 0.0, %v1319
      %v1321 = vpop.f32.mrb[0].mxu0
      %v1322 = vpop.f32.mrb[0].mxu0
      %v1323 = vadd.f32 0.0, %v1322
      %v1324 = vpop.f32.mrb[0].mxu0
      %1325 = vmatprep.mubr.bf16.mxu0 0
      %1326 = vmatmul.mubr.bf16.gmra.mrb[0].mxu0 %v1245
      %v1327 = vpop.f32.mrb[0].mxu0
      %v1328 = vadd.f32 0.0, %v1327
      %v1329 = vpop.f32.mrb[0].mxu0
      %v1330 = vpop.f32.mrb[0].mxu0
      %v1331 = vadd.f32 0.0, %v1330
      %v1332 = vpop.f32.mrb[0].mxu0
      %1333 = vmatprep.mubr.bf16.mxu0 0
      %1334 = vmatmul.mubr.bf16.gmra.mrb[0].mxu0 %v1248
      %v1335 = vpop.f32.mrb[0].mxu0
      %v1336 = vadd.f32 0.0, %v1335
      %v1337 = vpop.f32.mrb[0].mxu0
      %v1338 = vpop.f32.mrb[0].mxu0
      %v1339 = vadd.f32 0.0, %v1338
      %v1340 = vpop.f32.mrb[0].mxu0
      %1341 = vmatprep.mubr.bf16.mxu0 0
      %1342 = vmatmul.mubr.bf16.gmra.mrb[0].mxu0 %v1251
      %v1343 = vpop.f32.mrb[0].mxu0
      %v1344 = vadd.f32 0.0, %v1343
      %v1345 = vpop.f32.mrb[0].mxu0
      %v1346 = vpop.f32.mrb[0].mxu0
      %v1347 = vadd.f32 0.0, %v1346
      %v1348 = vpop.f32.mrb[0].mxu0
      %1349 = vdwg.mxu0
      %v1350 = vadd.f32 %v910, %v1288
      %v1351 = vadd.f32 %v913, %v1291
      %v1352 = vadd.f32 %v918, %v1296
      %v1353 = vadd.f32 %v921, %v1299
      %v1354 = vadd.f32 %v926, %v1304
      %v1355 = vadd.f32 %v929, %v1307
      %v1356 = vadd.f32 %v934, %v1312
      %v1357 = vadd.f32 %v937, %v1315
      %v1358 = vadd.f32 %v942, %v1320
      %v1359 = vadd.f32 %v945, %v1323
      %v1360 = vadd.f32 %v950, %v1328
      %v1361 = vadd.f32 %v953, %v1331
      %v1362 = vadd.f32 %v958, %v1336
      %v1363 = vadd.f32 %v961, %v1339
      %v1364 = vadd.f32 %v966, %v1344
      %v1365 = vadd.f32 %v969, %v1347
      %v1366 = vpack.c.bf16 %v1351, %v1350
      %v1367 = vpack.c.bf16 %v1353, %v1352
      %v1368 = vpack.c.bf16 %v1355, %v1354
      %v1369 = vpack.c.bf16 %v1357, %v1356
      %v1370 = vpack.c.bf16 %v1359, %v1358
      %v1371 = vpack.c.bf16 %v1361, %v1360
      %v1372 = vpack.c.bf16 %v1363, %v1362
      %v1373 = vpack.c.bf16 %v1365, %v1364
      %v1382 = vunpack.c.l.b16 %v1366
      %v1383 = vunpack.c.h.b16 %v1366
      %v1384 = vunpack.c.l.b16 %v1367
      %v1385 = vunpack.c.h.b16 %v1367
      %v1386 = vunpack.c.l.b16 %v1368
      %v1387 = vunpack.c.h.b16 %v1368
      %v1388 = vunpack.c.l.b16 %v1369
      %v1389 = vunpack.c.h.b16 %v1369
      %v1390 = vunpack.c.l.b16 %v1370
      %v1391 = vunpack.c.h.b16 %v1370
      %v1392 = vunpack.c.l.b16 %v1371
      %v1393 = vunpack.c.h.b16 %v1371
      %v1394 = vunpack.c.l.b16 %v1372
      %v1395 = vunpack.c.h.b16 %v1372
      %v1396 = vunpack.c.l.b16 %v1373
      %v1397 = vunpack.c.h.b16 %v1373
      %v1398 = vpack.c.b16 %v1382, %v1382
      %v1399 = vpack.c.b16 %v1383, %v1383
      %v1400 = vpack.c.b16 %v1384, %v1384
      %v1401 = vpack.c.b16 %v1385, %v1385
      %v1402 = vpack.c.b16 %v1386, %v1386
      %v1403 = vpack.c.b16 %v1387, %v1387
      %v1404 = vpack.c.b16 %v1388, %v1388
      %v1405 = vpack.c.b16 %v1389, %v1389
      %v1406 = vpack.c.b16 %v1390, %v1390
      %v1407 = vpack.c.b16 %v1391, %v1391
      %v1408 = vpack.c.b16 %v1392, %v1392
      %v1409 = vpack.c.b16 %v1393, %v1393
      %v1410 = vpack.c.b16 %v1394, %v1394
      %v1411 = vpack.c.b16 %v1395, %v1395
      %v1412 = vpack.c.b16 %v1396, %v1396
      %v1413 = vpack.c.b16 %v1397, %v1397
      %1430 = vst [vmem:[%s373] sm:$0xf] %v1398
      %1431 = vst [vmem:[%s373 + $0x4] sm:$0xf] %v1399
      %1432 = vst [vmem:[%s373 + $0x8] sm:$0xf] %v1400
      %1433 = vst [vmem:[%s373 + $0xc] sm:$0xf] %v1401
      %1434 = vst [vmem:[%s373 + $0x10] sm:$0xf] %v1402
      %1435 = vst [vmem:[%s373 + $0x14] sm:$0xf] %v1403
      %1436 = vst [vmem:[%s373 + $0x18] sm:$0xf] %v1404
      %1437 = vst [vmem:[%s373 + $0x1c] sm:$0xf] %v1405
      %1438 = vst [vmem:[%s373 + $0x20] sm:$0xf] %v1406
      %1439 = vst [vmem:[%s373 + $0x24] sm:$0xf] %v1407
      %1440 = vst [vmem:[%s373 + $0x28] sm:$0xf] %v1408
      %1441 = vst [vmem:[%s373 + $0x2c] sm:$0xf] %v1409
      %1442 = vst [vmem:[%s373 + $0x30] sm:$0xf] %v1410
      %1443 = vst [vmem:[%s373 + $0x34] sm:$0xf] %v1411
      %1444 = vst [vmem:[%s373 + $0x38] sm:$0xf] %v1412
      %1445 = vst [vmem:[%s373 + $0x3c] sm:$0xf] %v1413
      %s1446 = smul.u32 16, %s19
      %p1447 = scmp.lt.s32.totalorder %s1446, 31
      %s1448 = scalar_select %p1447, %s1446, 31
      %s1449 = smul.addr %s1448, 4
      %s1450 = scalar_lea.vmem %s8, %s1449
      // Predicated region
      $region53: #{forward.1} parent=51 // pred_check
        %p1451 = pneg %p225
      $region54: #{forward.1} parent=51 // pred_check_branch
        %1453 = sbr.rel (%p1451) target = $region56
      $region55: #{forward.1} parent=51 // pred_region
        %s1454 = smul.u32 16, %s19
      $region56: #{forward.1} parent=51 // pred_fallthru
        _
    $region52: #{forward.1} parent=5 // pred_fallthru
      _
    %p1455 = scmp.le.s32.totalorder 2, %s14
    // Predicated region
    $region57: #{forward.1} parent=5 // pred_check
      %p1456 = pneg %p1455
    $region58: #{forward.1} parent=5 // pred_check_branch
      %1458 = sbr.rel (%p1456) target = $region60
    $region59: #{forward.1} parent=5 // pred_region
      %s1459 = ssub.s32 %s14, 2
      // Predicated region
      $region61: #{forward.1} parent=59 // pred_check
        %p1460 = pneg %p231
      $region62: #{forward.1} parent=59 // pred_check_branch
        %1462 = sbr.rel (%p1460) target = $region64
      $region63: #{forward.1} parent=59 // pred_region
        %s1463 = smul.u32 16, %s20
        %p1464 = scmp.lt.s32.totalorder %s1463, 31
        %s1465 = scalar_select %p1464, %s1463, 31
        %s1466 = smul.addr %s1465, 4
        %s1467 = scalar_lea.vmem %s8, %s1466
      $region64: #{forward.1} parent=59 // pred_fallthru
        _
    $region60: #{forward.1} parent=5 // pred_fallthru
      _
  $region6: #{forward.1} parent=0 // loop_footer
    %s18 = sadd.s32 1, %s14
  $region7: #{forward.1} parent=0 // loop_footer_branch
    %13 = sbr.rel target = $region3
  $region8: #{forward.1} parent=0 // loop_exit
    _

</llo_original>
